<compile_context>
chip_gen: v7x
topology: tpu7x:2x2x1
jax: 0.10.0
libtpu: 0.0.40
codegen_flags: <defaults>
</compile_context>

<pallas_src>
import functools

import jax
import jax.numpy as jnp
from jax.experimental import pallas as pl
from jax.experimental.pallas import tpu as pltpu


def _round_up(x, m):
    return ((x + m - 1) // m) * m


def _dense_kernel(x_ref, w_ref, b_ref, o_ref):
    # x_ref: (TM, K)  w_ref: (K, Nout)  b_ref: (1, Nout)  o_ref: (TM, Nout)
    acc = jnp.dot(x_ref[...], w_ref[...], preferred_element_type=jnp.float32)
    acc = acc + b_ref[...].astype(jnp.float32)
    o_ref[...] = acc.astype(o_ref.dtype)


@functools.partial(jax.jit, static_argnames=("tile_m", "compute_dtype"))
def swin2sr_output_forward(hidden_states, weight, bias, tile_m=1024,
                           compute_dtype=jnp.bfloat16):
    """hidden_states: [B, L, K]; weight: [K, N]; bias: [N] -> [B, L, N]."""
    B, L, K = hidden_states.shape
    Kw, N = weight.shape
    assert K == Kw
    M = B * L
    out_dtype = hidden_states.dtype

    x2d = hidden_states.reshape(M, K)
    if compute_dtype is not None:
        x2d = x2d.astype(compute_dtype)
        weight = weight.astype(compute_dtype)
    bias = bias.astype(jnp.float32)

    # Narrow outputs (< 128 lanes) pay heavily for masked partial-lane stores:
    # pad with exact-zero weight columns / bias entries and slice afterwards.
    # Wider outputs (N >= 128) use the full feature dim directly and skip the
    # extra HBM read+write pass of a post-hoc slice.
    if N < 128:
        N_out = 128
        weight = jnp.pad(weight, ((0, 0), (0, N_out - N)))
        bias = jnp.pad(bias, (0, N_out - N))
    else:
        N_out = N
    b2d = bias.reshape(1, N_out)

    # Row tiling: multiple of 16 (bf16 sublane packing), capped at ceil(M/2)
    # rounded to 128 so the grid has >= 2 steps whenever M > 128 (v7x megacore
    # sharding), and clamped to the rounded row count for tiny inputs.  The
    # partial tail tile is handled by Pallas OOB masking (each output row only
    # depends on its own input row, so padded rows never leak into results).
    tm_cap = _round_up(pl.cdiv(M, 2), 128)
    tm = max(16, min(_round_up(tile_m, 16), tm_cap, _round_up(M, 16)))
    grid_m = pl.cdiv(M, tm)

    in_itemsize = jnp.dtype(x2d.dtype).itemsize
    w_itemsize = jnp.dtype(weight.dtype).itemsize
    out_itemsize = jnp.dtype(out_dtype).itemsize

    cost = pl.CostEstimate(
        flops=2 * M * K * N,
        transcendentals=0,
        bytes_accessed=(M * K * in_itemsize + K * N * w_itemsize + N * 4
                        + M * N * out_itemsize),
    )

    # VMEM budget: double-buffered activation + output tiles, plus the resident
    # weight/bias (still allocated twice by the default pipeline).  Only raise
    # the scoped limit when we would exceed v5e's 16 MiB default.
    vmem_needed = (2 * tm * K * in_itemsize
                   + 2 * (K * N_out + N_out) * w_itemsize
                   + 2 * tm * N_out * out_itemsize)
    vmem_limit = None
    if vmem_needed > 12 * 1024 * 1024:
        vmem_limit = int(min(2 * vmem_needed, 100 * 1024 * 1024))

    out2d = pl.pallas_call(
        _dense_kernel,
        out_shape=jax.ShapeDtypeStruct((M, N_out), out_dtype),
        grid_spec=pltpu.PrefetchScalarGridSpec(
            num_scalar_prefetch=0,
            grid=(grid_m,),
            in_specs=[
                pl.BlockSpec((tm, K), lambda i: (i, 0)),      # streamed activation rows
                pl.BlockSpec((K, N_out), lambda i: (0, 0)),   # resident weight
                pl.BlockSpec((1, N_out), lambda i: (0, 0)),   # resident bias
            ],
            out_specs=pl.BlockSpec((tm, N_out), lambda i: (i, 0)),
        ),
        compiler_params=pltpu.CompilerParams(
            dimension_semantics=("parallel",),  # megacore sharding on v7x
            vmem_limit_bytes=vmem_limit,
        ),
        cost_estimate=cost,
    )(x2d, weight, b2d)

    if N_out != N:
        out2d = out2d[:, :N]

    # Dropout with hidden_dropout_prob = 0.0 / eval mode => identity.
    return out2d.reshape(B, L, N)


if __name__ == "__main__":
    key = jax.random.PRNGKey(0)

    def make_case(batch, seq, dim, mlp_ratio, k):
        intermediate = int(mlp_ratio * dim)
        k_x, k_w, k_b = jax.random.split(k, 3)
        x = jax.random.normal(k_x, (batch, seq, intermediate), dtype=jnp.float32)
        # nn.Linear weight is [out, in]; stored here as [in, out].
        w = (jax.random.normal(k_w, (intermediate, dim), dtype=jnp.float32)
             * (1.0 / jnp.sqrt(intermediate)))
        b = jax.random.normal(k_b, (dim,), dtype=jnp.float32) * 0.02
        return x, w, b

    k1, k2 = jax.random.split(key)

    # Case 1: dim=32 (narrow output -> padded lane-dense path); M = 192 rows
    # -> 2-step grid with a masked tail tile.
    x1, w1, b1 = make_case(2, 96, 32, 2.0, k1)
    out1 = swin2sr_output_forward(x1, w1, b1)
    out1_small = swin2sr_output_forward(x1, w1, b1, tile_m=64)  # 3 full steps

    # Case 2: dim=128 (wide output -> unpadded path, no post-hoc slice).
    x2, w2, b2 = make_case(2, 96, 128, 2.0, k2)
    out2 = swin2sr_output_forward(x2, w2, b2)

    jax.block_until_ready((out1, out1_small, out2))

    def ref_fp32(x, w, b):
        B, L, K = x.shape
        return (x.reshape(-1, K) @ w + b).reshape(B, L, -1)

    def ref_bf16(x, w, b):
        B, L, K = x.shape
        xq = x.astype(jnp.bfloat16).astype(jnp.float32).reshape(-1, K)
        wq = w.astype(jnp.bfloat16).astype(jnp.float32)
        return (xq @ wq + b).reshape(B, L, -1)

    for out, (x, w, b) in [(out1, (x1, w1, b1)),
                           (out1_small, (x1, w1, b1)),
                           (out2, (x2, w2, b2))]:
        assert out.shape == x.shape[:2] + (w.shape[1],)
        assert out.dtype == x.dtype
        # bf16 inputs with f32 accumulation: loose vs. the full-f32 reference...
        assert jnp.allclose(out, ref_fp32(x, w, b), atol=3e-2, rtol=3e-2)
        # ...tight vs. the bf16-quantized-input reference (same rounding).
        assert jnp.allclose(out, ref_bf16(x, w, b), atol=1e-4, rtol=1e-4)

    print("KERNEL_OK")
</pallas_src>

<mosaic_0001>
module attributes {stable_mosaic.version = 11 : i64} {
  func.func @_dense_kernel(%arg0: i32, %arg1: memref<128x64xbf16, #tpu.memory_space<vmem>>, %arg2: memref<64x128xbf16, #tpu.memory_space<vmem>>, %arg3: memref<1x128xf32, #tpu.memory_space<vmem>>, %arg4: memref<128x128xf32, #tpu.memory_space<vmem>>) attributes {dimension_semantics = [#tpu.dimension_semantics<parallel>], iteration_bounds = array<i64: 2>, scalar_prefetch = 0 : i64, scratch_operands = 0 : i64, tpu.core_type = #tpu.core_type<tc>, window_params = [{transform_indices = @transform_0, window_bounds = array<i64: 128, 64>}, {pipeline_mode = #tpu.pipeline_mode<synchronous>, transform_indices = @transform_1, window_bounds = array<i64: 64, 128>}, {pipeline_mode = #tpu.pipeline_mode<synchronous>, transform_indices = @transform_2, window_bounds = array<i64: 1, 128>}, {transform_indices = @transform_3, window_bounds = array<i64: 128, 128>}]} {
    %c0 = arith.constant 0 : index
    %c0_0 = arith.constant 0 : index
    %0 = vector.load %arg1[%c0, %c0_0] : memref<128x64xbf16, #tpu.memory_space<vmem>>, vector<128x64xbf16>
    %c0_1 = arith.constant 0 : index
    %c0_2 = arith.constant 0 : index
    %1 = vector.load %arg2[%c0_1, %c0_2] : memref<64x128xbf16, #tpu.memory_space<vmem>>, vector<64x128xbf16>
    %cst = arith.constant dense<0.000000e+00> : vector<128x128xf32>
    %2 = tpu.matmul %0, %1, %cst {dimension_numbers = #tpu.dot_dimension_numbers<[1], [0], [0], [1], [0, 0, 1, 1], [], []>} : vector<128x64xbf16>, vector<64x128xbf16>, vector<128x128xf32> -> vector<128x128xf32>
    %c0_3 = arith.constant 0 : index
    %c0_4 = arith.constant 0 : index
    %3 = vector.load %arg3[%c0_3, %c0_4] : memref<1x128xf32, #tpu.memory_space<vmem>>, vector<1x128xf32>
    %4 = vector.broadcast %3 : vector<1x128xf32> to vector<128x128xf32>
    %5 = arith.addf %2, %4 : vector<128x128xf32>
    %c0_5 = arith.constant 0 : index
    %c0_6 = arith.constant 0 : index
    %6 = vector.load %arg4[%c0_5, %c0_6] : memref<128x128xf32, #tpu.memory_space<vmem>>, vector<128x128xf32>
    tpu.vector_store %arg4[%c0_5, %c0_6], %5 {strides = array<i32>} : memref<128x128xf32, #tpu.memory_space<vmem>>, vector<128x128xf32>,
    return
  }
  func.func @transform_0(%arg0: i32) -> (i32, i32) {
    %c0_i32 = arith.constant 0 : i32
    %c0_i32_0 = arith.constant 0 : i32
    return %arg0, %c0_i32 : i32, i32
  }
  func.func @transform_1(%arg0: i32) -> (i32, i32) {
    %c0_i32 = arith.constant 0 : i32
    %c0_i32_0 = arith.constant 0 : i32
    %c0_i32_1 = arith.constant 0 : i32
    return %c0_i32, %c0_i32_0 : i32, i32
  }
  func.func @transform_2(%arg0: i32) -> (i32, i32) {
    %c0_i32 = arith.constant 0 : i32
    %c0_i32_0 = arith.constant 0 : i32
    %c0_i32_1 = arith.constant 0 : i32
    return %c0_i32, %c0_i32_0 : i32, i32
  }
  func.func @transform_3(%arg0: i32) -> (i32, i32) {
    %c0_i32 = arith.constant 0 : i32
    %c0_i32_0 = arith.constant 0 : i32
    return %arg0, %c0_i32 : i32, i32
  }
}

</mosaic_0001>

<llo_original>
// kernel: swin2sr_output_forward.1
$region0: #{swin2sr_output_forward.1}
  #allocation0 [shape = 'u32[]', space=smem, size = 0x4, offset = 0x4, fixed_abs, tag = 'smem constant byte address 0x4 - core index']
  #allocation1 [shape = 'u32[144,128]{1,0:T(1,128)}', space=vmem, size = 0x12000, scoped, tag = 'internal scratch']
  %s0 = inlined_call_operand.vmem [shape: bf16[192,64], index: 0, kind: input, shape index: {}]
  %s1 = inlined_call_operand.vmem [shape: bf16[64,128], index: 1, kind: input, shape index: {}]
  %s2 = inlined_call_operand.vmem [shape: f32[1,128], index: 2, kind: input, shape index: {}]
  %s3 = inlined_call_operand.vmem [shape: f32[192,128], index: 3, kind: output, shape index: {}]
  %s4 = sld [smem:[#allocation0]]
  $region93: #{swin2sr_output_forward.1} parent=0
    _
  %s6 = ssub.s32 1, %s4
  %s7 = scalar_select 0, %s6, %s4
  $region1: #{swin2sr_output_forward.1} parent=0
    #allocation2 [shape = 'u8[131072]{0}', space=vmem, size = 0x20000, scoped, tag = 'output window, operand 0']
    loop: start=0, step=1, limit=4
    $region2: #{swin2sr_output_forward.1} parent=1 // loop_pre_header
      _
    $region3: #{swin2sr_output_forward.1} parent=1 // loop_header
      %s9 = sphi 0, %s13
      %p10 = scmp.ge.s32.totalorder %s9, 4
      %s19 = sphi 0, %s21
      %s22 = sphi 0, %s19
      %s23 = sphi 0, %s22
      %s39 = sphi 0, %s23
      %s43 = sphi 0, %s43
      %s45 = sphi 0, %s43
      %s46 = sphi 0, %s45
      %s60 = sphi 0, %s46
      %s64 = sphi 0, %s64
      %s66 = sphi 0, %s64
      %s67 = sphi 0, %s66
      %s81 = sphi 0, %s67
      %s87 = sphi 0, %s89
      %s90 = sphi 0, %s87
      %s91 = sphi 0, %s90
      %s107 = sphi 0, %s91
    $region4: #{swin2sr_output_forward.1} parent=1 // loop_header_branch
      %12 = sbr.rel (%p10) target = $region8
    $region5: #{swin2sr_output_forward.1} parent=1 // loop_body
      %s14 = ssub.s32 %s9, 1
      %s15 = ssub.s32 %s9, 2
      %s16 = sadd.s32 %s9, 1
      %s17 = ssub.s32 %s9, %s16
      %p18 = scmp.eq.s32.totalorder %s17, 0
      %s20 = sadd.s32 %s19, 1
      %s21 = scalar_select %p18, %s19, %s20
      %p24 = pneg %p18
      %p25 = scmp.eq.s32.totalorder %s9, 1
      %p26 = por %p24, %p25
      %p27 = scmp.ne.s32.totalorder %s19, %s22
      %p28 = scmp.eq.s32.totalorder %s9, 0
      %p29 = por %p27, %p28
      %p30 = scmp.ne.s32.totalorder %s19, %s22
      %p31 = scmp.eq.s32.totalorder %s14, 1
      %p32 = por %p30, %p31
      %p33 = scmp.ne.s32.totalorder %s22, %s23
      %p34 = scmp.eq.s32.totalorder %s14, 0
      %p35 = por %p33, %p34
      %p36 = scmp.ne.s32.totalorder %s22, %s23
      %p37 = scmp.eq.s32.totalorder %s15, 1
      %p38 = por %p36, %p37
      %p40 = scmp.ne.s32.totalorder %s23, %s39
      %p41 = scmp.eq.s32.totalorder %s15, 0
      %p42 = por %p40, %p41
      %s44 = sadd.s32 %s43, 1
      %p47 = scmp.eq.s32.totalorder %s9, 1
      %p48 = scmp.ne.s32.totalorder %s43, %s45
      %p49 = scmp.eq.s32.totalorder %s9, 0
      %p50 = por %p48, %p49
      %p51 = scmp.ne.s32.totalorder %s43, %s45
      %p52 = scmp.eq.s32.totalorder %s14, 1
      %p53 = por %p51, %p52
      %p54 = scmp.ne.s32.totalorder %s45, %s46
      %p55 = scmp.eq.s32.totalorder %s14, 0
      %p56 = por %p54, %p55
      %p57 = scmp.ne.s32.totalorder %s45, %s46
      %p58 = scmp.eq.s32.totalorder %s15, 1
      %p59 = por %p57, %p58
      %p61 = scmp.ne.s32.totalorder %s46, %s60
      %p62 = scmp.eq.s32.totalorder %s15, 0
      %p63 = por %p61, %p62
      %s65 = sadd.s32 %s64, 1
      %p68 = scmp.eq.s32.totalorder %s9, 1
      %p69 = scmp.ne.s32.totalorder %s64, %s66
      %p70 = scmp.eq.s32.totalorder %s9, 0
      %p71 = por %p69, %p70
      %p72 = scmp.ne.s32.totalorder %s64, %s66
      %p73 = scmp.eq.s32.totalorder %s14, 1
      %p74 = por %p72, %p73
      %p75 = scmp.ne.s32.totalorder %s66, %s67
      %p76 = scmp.eq.s32.totalorder %s14, 0
      %p77 = por %p75, %p76
      %p78 = scmp.ne.s32.totalorder %s66, %s67
      %p79 = scmp.eq.s32.totalorder %s15, 1
      %p80 = por %p78, %p79
      %p82 = scmp.ne.s32.totalorder %s67, %s81
      %p83 = scmp.eq.s32.totalorder %s15, 0
      %p84 = por %p82, %p83
      %s85 = ssub.s32 %s9, %s16
      %p86 = scmp.eq.s32.totalorder %s85, 0
      %s88 = sadd.s32 %s87, 1
      %s89 = scalar_select %p86, %s87, %s88
      %p92 = pneg %p86
      %p93 = scmp.eq.s32.totalorder %s9, 1
      %p94 = por %p92, %p93
      %p95 = scmp.ne.s32.totalorder %s87, %s90
      %p96 = scmp.eq.s32.totalorder %s9, 0
      %p97 = por %p95, %p96
      %p98 = scmp.ne.s32.totalorder %s87, %s90
      %p99 = scmp.eq.s32.totalorder %s14, 1
      %p100 = por %p98, %p99
      %p101 = scmp.ne.s32.totalorder %s90, %s91
      %p102 = scmp.eq.s32.totalorder %s14, 0
      %p103 = por %p101, %p102
      %p104 = scmp.ne.s32.totalorder %s90, %s91
      %p105 = scmp.eq.s32.totalorder %s15, 1
      %p106 = por %p104, %p105
      %p108 = scmp.ne.s32.totalorder %s91, %s107
      %p109 = scmp.eq.s32.totalorder %s15, 0
      %p110 = por %p108, %p109
      %p111 = scmp.le.s32.totalorder 1, %s9
      %p112 = scmp.lt.s32.totalorder %s9, 3
      %p113 = pnand %p111, %p112
      %p114 = pneg %p113
      // Predicated region
      $region9: #{swin2sr_output_forward.1} parent=5 // pred_check
        _
      $region10: #{swin2sr_output_forward.1} parent=5 // pred_check_branch
        %116 = sbr.rel (%p113) target = $region12
      $region11: #{swin2sr_output_forward.1} parent=5 // pred_region
        %s117 = ssub.s32 %s9, 1
        // Predicated region
        $region13: #{swin2sr_output_forward.1} parent=11 // pred_check
          %p118 = pneg %p56
        $region14: #{swin2sr_output_forward.1} parent=11 // pred_check_branch
          %120 = sbr.rel (%p118) target = $region16
        $region15: #{swin2sr_output_forward.1} parent=11 // pred_region
          _
        $region16: #{swin2sr_output_forward.1} parent=11 // pred_fallthru
          _
        // Predicated region
        $region17: #{swin2sr_output_forward.1} parent=11 // pred_check
          %p121 = pneg %p77
        $region18: #{swin2sr_output_forward.1} parent=11 // pred_check_branch
          %123 = sbr.rel (%p121) target = $region20
        $region19: #{swin2sr_output_forward.1} parent=11 // pred_region
          _
        $region20: #{swin2sr_output_forward.1} parent=11 // pred_fallthru
          _
      $region12: #{swin2sr_output_forward.1} parent=5 // pred_fallthru
        _
      %p124 = scmp.lt.s32.totalorder %s9, 2
      // Predicated region
      $region21: #{swin2sr_output_forward.1} parent=5 // pred_check
        %p125 = pneg %p124
      $region22: #{swin2sr_output_forward.1} parent=5 // pred_check_branch
        %127 = sbr.rel (%p125) target = $region24
      $region23: #{swin2sr_output_forward.1} parent=5 // pred_region
        // Predicated region
        $region25: #{swin2sr_output_forward.1} parent=23 // pred_check
          %p128 = pneg %p29
        $region26: #{swin2sr_output_forward.1} parent=23 // pred_check_branch
          %130 = sbr.rel (%p128) target = $region28
        $region27: #{swin2sr_output_forward.1} parent=23 // pred_region
          %s131 = smul.u32 16, %s9
          %s132 = ssub.s32 24, %s131
          %p133 = scmp.lt.s32.totalorder %s132, 16
          %s134 = scalar_select %p133, %s132, 16
          %s135 = smul.u32 64, %s134
          %p136 = scmp.lt.s32.totalorder %s131, 23
          %s137 = scalar_select %p136, %s131, 23
          %s138 = smul.addr %s137, 4
          %s139 = scalar_lea.vmem %s0, %s138
          %s140 = smul.u32 16, %s9
          %s141 = ssub.s32 24, %s140
          %p142 = scmp.lt.s32.totalorder %s141, 16
          %s143 = scalar_select %p142, %s141, 16
          %s144 = smul.u32 64, %s143
        $region28: #{swin2sr_output_forward.1} parent=23 // pred_fallthru
          _
      $region24: #{swin2sr_output_forward.1} parent=5 // pred_fallthru
        _
      %p145 = scmp.le.s32.totalorder 1, %s9
      %p146 = scmp.lt.s32.totalorder %s9, 3
      %p147 = pnand %p145, %p146
      %p148 = pneg %p147
      // Predicated region
      $region29: #{swin2sr_output_forward.1} parent=5 // pred_check
        _
      $region30: #{swin2sr_output_forward.1} parent=5 // pred_check_branch
        %150 = sbr.rel (%p147) target = $region32
      $region31: #{swin2sr_output_forward.1} parent=5 // pred_region
        %s151 = ssub.s32 %s9, 1
        %s152 = smul.u32 16, %s14
        %s153 = ssub.s32 24, %s152
        %p154 = scmp.lt.s32.totalorder %s153, 16
        %s155 = scalar_select %p154, %s153, 16
        %s156 = smul.u32 64, %s155
        %p157 = scmp.lt.s32.totalorder %s152, 23
        %s158 = scalar_select %p157, %s152, 23
        %s159 = smul.addr %s158, 4
        %s160 = scalar_lea.vmem %s0, %s159
        %p161 = pneg %p35
        %p162 = pneg %p32
        %p163 = pneg %p56
        %p164 = pneg %p53
        %p165 = pneg %p77
        %p166 = pneg %p74
        %p167 = pneg %p103
        %p168 = pneg %p100
        %s169 = sand.u32 %s90, 1
        %s170 = sand.u32 %s90, 1
        %s171 = smul.addr %s170, 128
        %s172 = scalar_lea.vmem [#allocation2], %s171
        %s173 = smul.u32 16, %s14
        %s174 = ssub.s32 24, %s173
        %p175 = scmp.lt.s32.totalorder %s174, 16
        %s176 = scalar_select %p175, %s174, 16
        %s177 = smul.u32 64, %s176
        %p178 = scmp.lt.s32.totalorder %s173, 23
        %s179 = scalar_select %p178, %s173, 23
        %s180 = smul.addr %s179, 4
        %s181 = scalar_lea.vmem %s0, %s180
        %s182 = smul.u32 16, %s14
        %s183 = ssub.s32 24, %s182
        %p184 = scmp.lt.s32.totalorder %s183, 16
        %s185 = scalar_select %p184, %s183, 16
        %s186 = smul.u32 64, %s185
        %s187 = smul.u32 16, %s14
        %s188 = ssub.s32 24, %s187
        %p189 = scmp.lt.s32.totalorder %s188, 16
        %s190 = scalar_select %p189, %s188, 16
        %s191 = smul.u32 128, %s190
        %v193 = vld [vmem:[%s181] sm:$0xf]
        %v194 = vld [vmem:[%s181 + $0x4] sm:$0xf]
        %v195 = vld [vmem:[%s181 + $0x8] sm:$0xf]
        %v196 = vld [vmem:[%s181 + $0xc] sm:$0xf]
        %v197 = vld [vmem:[%s181 + $0x10] sm:$0xf]
        %v198 = vld [vmem:[%s181 + $0x14] sm:$0xf]
        %v199 = vld [vmem:[%s181 + $0x18] sm:$0xf]
        %v200 = vld [vmem:[%s181 + $0x1c] sm:$0xf]
        %v201 = vld [vmem:[%s181 + $0x20] sm:$0xf]
        %v202 = vld [vmem:[%s181 + $0x24] sm:$0xf]
        %v203 = vld [vmem:[%s181 + $0x28] sm:$0xf]
        %v204 = vld [vmem:[%s181 + $0x2c] sm:$0xf]
        %v205 = vld [vmem:[%s181 + $0x30] sm:$0xf]
        %v206 = vld [vmem:[%s181 + $0x34] sm:$0xf]
        %v207 = vld [vmem:[%s181 + $0x38] sm:$0xf]
        %v208 = vld [vmem:[%s181 + $0x3c] sm:$0xf]
        %v209 = vld [vmem:[%s1] sm:$0xf]
        %v210 = vld [vmem:[%s1 + $0x4] sm:$0xf]
        %v211 = vld [vmem:[%s1 + $0x8] sm:$0xf]
        %v212 = vld [vmem:[%s1 + $0xc] sm:$0xf]
        %v213 = vld [vmem:[%s1 + $0x10] sm:$0xf]
        %v214 = vld [vmem:[%s1 + $0x14] sm:$0xf]
        %v215 = vld [vmem:[%s1 + $0x18] sm:$0xf]
        %v216 = vld [vmem:[%s1 + $0x1c] sm:$0xf]
        %v217 = vld [vmem:[%s2] sm:$0x1]
        %v219 = vlaneseq
        %v220 = vshrl.u32 %v219, 7
        %v221 = vsub.s32 0, %v220
        %v222 = vrot.slane %v217, %v221
        %v240 = vunpack.c.l.b16 %v193
        %v241 = vunpack.c.l.b16 %v194
        %v242 = vunpack.c.l.b16 %v195
        %v243 = vunpack.c.l.b16 %v196
        %v244 = vunpack.c.l.b16 %v197
        %v245 = vunpack.c.l.b16 %v198
        %v246 = vunpack.c.l.b16 %v199
        %v247 = vunpack.c.l.b16 %v200
        %v248 = vunpack.c.l.b16 %v201
        %v249 = vunpack.c.l.b16 %v202
        %v250 = vunpack.c.l.b16 %v203
        %v251 = vunpack.c.l.b16 %v204
        %v252 = vunpack.c.l.b16 %v205
        %v253 = vunpack.c.l.b16 %v206
        %v254 = vunpack.c.l.b16 %v207
        %v255 = vunpack.c.l.b16 %v208
        %v256 = vpack.c.b16 %v241, %v240
        %v257 = vpack.c.b16 %v243, %v242
        %v258 = vpack.c.b16 %v245, %v244
        %v259 = vpack.c.b16 %v247, %v246
        %v260 = vpack.c.b16 %v249, %v248
        %v261 = vpack.c.b16 %v251, %v250
        %v262 = vpack.c.b16 %v253, %v252
        %v263 = vpack.c.b16 %v255, %v254
        %v272 = vunpack.c.l.b16 %v209
        %v273 = vunpack.c.l.b16 %v210
        %v274 = vunpack.c.l.b16 %v211
        %v275 = vunpack.c.l.b16 %v212
        %v276 = vunpack.c.l.b16 %v213
        %v277 = vunpack.c.l.b16 %v214
        %v278 = vunpack.c.l.b16 %v215
        %v279 = vunpack.c.l.b16 %v216
        %v280 = vpack.c.b16 %v273, %v272
        %v281 = vpack.c.b16 %v275, %v274
        %v282 = vpack.c.b16 %v277, %v276
        %v283 = vpack.c.b16 %v279, %v278
        %vm288 = vcmask 523264
        %v290 = vsel %vm288, %v256, 0
        %v293 = vsel %vm288, %v257, 0
        %v296 = vsel %vm288, %v258, 0
        %v299 = vsel %vm288, %v259, 0
        %v302 = vsel %vm288, %v260, 0
        %v305 = vsel %vm288, %v261, 0
        %v308 = vsel %vm288, %v262, 0
        %v311 = vsel %vm288, %v263, 0
        %313 = vmatprep.subr.bf16.mxu0 0
        %314 = vmatpush1.bf16.msra.mxu0 %v280
        %315 = vmatprep.subr.bf16.mxu0 0
        %316 = vmatpush1.bf16.msra.mxu0 %v281
        %317 = vmatprep.subr.bf16.mxu0 0
        %318 = vmatpush1.bf16.msra.mxu0 %v282
        %319 = vmatprep.subr.bf16.mxu0 0
        %320 = vmatpush1.bf16.msra.mxu0 %v283
        %321 = vmatprep.subr.bf16.mxu0 0
        %322 = vmatpush1.bf16.msra.mxu0 0
        %323 = vmatprep.subr.bf16.mxu0 0
        %324 = vmatpush1.bf16.msra.mxu0 0
        %325 = vmatprep.subr.bf16.mxu0 0
        %326 = vmatpush1.bf16.msra.mxu0 0
        %327 = vmatprep.subr.bf16.mxu0 0
        %328 = vmatpush1.bf16.msra.mxu0 0
        %329 = vmatprep.subr.bf16.mxu0 0
        %330 = vmatpush1.bf16.msra.mxu0 0
        %331 = vmatprep.subr.bf16.mxu0 0
        %332 = vmatpush1.bf16.msra.mxu0 0
        %333 = vmatprep.subr.bf16.mxu0 0
        %334 = vmatpush1.bf16.msra.mxu0 0
        %335 = vmatprep.subr.bf16.mxu0 0
        %336 = vmatpush1.bf16.msra.mxu0 0
        %337 = vmatprep.subr.bf16.mxu0 0
        %338 = vmatpush1.bf16.msra.mxu0 0
        %339 = vmatprep.subr.bf16.mxu0 0
        %340 = vmatpush1.bf16.msra.mxu0 0
        %341 = vmatprep.subr.bf16.mxu0 0
        %342 = vmatpush1.bf16.msra.mxu0 0
        %343 = vmatprep.subr.bf16.mxu0 0
        %344 = vmatpush1.bf16.msra.mxu0 0
        %345 = vmatprep.mubr.bf16.mxu0 0
        %346 = vmatmul.mubr.bf16.gmra.mrb[0].mxu0 %v290
        %v347 = vpop.f32.mrb[0].mxu0
        %v348 = vadd.f32 %v222, %v347
        %v349 = vpop.f32.mrb[0].mxu0
        %v350 = vpop.f32.mrb[0].mxu0
        %v351 = vadd.f32 %v222, %v350
        %v352 = vpop.f32.mrb[0].mxu0
        %353 = vmatprep.mubr.bf16.mxu0 0
        %354 = vmatmul.mubr.bf16.gmra.mrb[0].mxu0 %v293
        %v355 = vpop.f32.mrb[0].mxu0
        %v356 = vadd.f32 %v222, %v355
        %v357 = vpop.f32.mrb[0].mxu0
        %v358 = vpop.f32.mrb[0].mxu0
        %v359 = vadd.f32 %v222, %v358
        %v360 = vpop.f32.mrb[0].mxu0
        %361 = vmatprep.mubr.bf16.mxu0 0
        %362 = vmatmul.mubr.bf16.gmra.mrb[0].mxu0 %v296
        %v363 = vpop.f32.mrb[0].mxu0
        %v364 = vadd.f32 %v222, %v363
        %v365 = vpop.f32.mrb[0].mxu0
        %v366 = vpop.f32.mrb[0].mxu0
        %v367 = vadd.f32 %v222, %v366
        %v368 = vpop.f32.mrb[0].mxu0
        %369 = vmatprep.mubr.bf16.mxu0 0
        %370 = vmatmul.mubr.bf16.gmra.mrb[0].mxu0 %v299
        %v371 = vpop.f32.mrb[0].mxu0
        %v372 = vadd.f32 %v222, %v371
        %v373 = vpop.f32.mrb[0].mxu0
        %v374 = vpop.f32.mrb[0].mxu0
        %v375 = vadd.f32 %v222, %v374
        %v376 = vpop.f32.mrb[0].mxu0
        %377 = vmatprep.mubr.bf16.mxu0 0
        %378 = vmatmul.mubr.bf16.gmra.mrb[0].mxu0 %v302
        %v379 = vpop.f32.mrb[0].mxu0
        %v380 = vadd.f32 %v222, %v379
        %v381 = vpop.f32.mrb[0].mxu0
        %v382 = vpop.f32.mrb[0].mxu0
        %v383 = vadd.f32 %v222, %v382
        %v384 = vpop.f32.mrb[0].mxu0
        %385 = vmatprep.mubr.bf16.mxu0 0
        %386 = vmatmul.mubr.bf16.gmra.mrb[0].mxu0 %v305
        %v387 = vpop.f32.mrb[0].mxu0
        %v388 = vadd.f32 %v222, %v387
        %v389 = vpop.f32.mrb[0].mxu0
        %v390 = vpop.f32.mrb[0].mxu0
        %v391 = vadd.f32 %v222, %v390
        %v392 = vpop.f32.mrb[0].mxu0
        %393 = vmatprep.mubr.bf16.mxu0 0
        %394 = vmatmul.mubr.bf16.gmra.mrb[0].mxu0 %v308
        %v395 = vpop.f32.mrb[0].mxu0
        %v396 = vadd.f32 %v222, %v395
        %v397 = vpop.f32.mrb[0].mxu0
        %v398 = vpop.f32.mrb[0].mxu0
        %v399 = vadd.f32 %v222, %v398
        %v400 = vpop.f32.mrb[0].mxu0
        %401 = vmatprep.mubr.bf16.mxu0 0
        %402 = vmatmul.mubr.bf16.gmra.mrb[0].mxu0 %v311
        %v403 = vpop.f32.mrb[0].mxu0
        %v404 = vadd.f32 %v222, %v403
        %v405 = vpop.f32.mrb[0].mxu0
        %v406 = vpop.f32.mrb[0].mxu0
        %v407 = vadd.f32 %v222, %v406
        %v408 = vpop.f32.mrb[0].mxu0
        %409 = vdwg.mxu0
        %410 = vst [vmem:[%s172] sm:$0xff] %v348
        %411 = vst [vmem:[%s172 + $0x8] sm:$0xff] %v351
        %412 = vst [vmem:[%s172 + $0x10] sm:$0xff] %v356
        %413 = vst [vmem:[%s172 + $0x18] sm:$0xff] %v359
        %414 = vst [vmem:[%s172 + $0x20] sm:$0xff] %v364
        %415 = vst [vmem:[%s172 + $0x28] sm:$0xff] %v367
        %416 = vst [vmem:[%s172 + $0x30] sm:$0xff] %v372
        %417 = vst [vmem:[%s172 + $0x38] sm:$0xff] %v375
        %418 = vst [vmem:[%s172 + $0x40] sm:$0xff] %v380
        %419 = vst [vmem:[%s172 + $0x48] sm:$0xff] %v383
        %420 = vst [vmem:[%s172 + $0x50] sm:$0xff] %v388
        %421 = vst [vmem:[%s172 + $0x58] sm:$0xff] %v391
        %422 = vst [vmem:[%s172 + $0x60] sm:$0xff] %v396
        %423 = vst [vmem:[%s172 + $0x68] sm:$0xff] %v399
        %424 = vst [vmem:[%s172 + $0x70] sm:$0xff] %v404
        %425 = vst [vmem:[%s172 + $0x78] sm:$0xff] %v407
        %s426 = sand.u32 %s90, 1
        %s427 = sand.u32 %s90, 1
        %s428 = smul.addr %s427, 128
        %s429 = scalar_lea.vmem [#allocation2], %s428
        // Predicated region
        $region33: #{swin2sr_output_forward.1} parent=31 // pred_check
          %p430 = pneg %p100
        $region34: #{swin2sr_output_forward.1} parent=31 // pred_check_branch
          %432 = sbr.rel (%p430) target = $region36
        $region35: #{swin2sr_output_forward.1} parent=31 // pred_region
          %s433 = smul.u32 16, %s14
          %s434 = ssub.s32 24, %s433
          %p435 = scmp.lt.s32.totalorder %s434, 16
          %s436 = scalar_select %p435, %s434, 16
          %s437 = smul.u32 128, %s436
          %p438 = scmp.ne.s32.totalorder 0, %s437
          %s439 = smul.addr %s433, 8
          %s440 = scalar_lea.vmem %s3, %s439
          // Predicated region
          $region37: #{swin2sr_output_forward.1} parent=35 // pred_check
            %p441 = pneg %p438
          $region38: #{swin2sr_output_forward.1} parent=35 // pred_check_branch
            %443 = sbr.rel (%p441) target = $region40
          $region39: #{swin2sr_output_forward.1} parent=35 // pred_region
            // Predicated region
            $region41: #{swin2sr_output_forward.1} parent=39 // pred_check
              _
            $region42: #{swin2sr_output_forward.1} parent=39 // pred_check_branch
              %445 = sbr.rel (0) target = $region44
            $region43: #{swin2sr_output_forward.1} parent=39 // pred_region
              // Predicated region
              $region63: #{swin2sr_output_forward.1} parent=43 // pred_check
                _
              $region64: #{swin2sr_output_forward.1} parent=43 // pred_check_branch
                %524 = sbr.rel (0) target = $region66
              $region65: #{swin2sr_output_forward.1} parent=43 // pred_region
                %s525 = sshrl.u32 %s436, 4
                // While loop
                $region67: #{swin2sr_output_forward.1} parent=65 // loop_pre_header
                  _
                $region68: #{swin2sr_output_forward.1} parent=65 // loop_header
                  %s527 = sphi 0, %s529
                  %p528 = scmp.ge.s32.totalorder %s527, %s525
                  %s532 = sphi 0, %s569
                  %s533 = sphi %s429, %s572
                  %s534 = sphi %s440, %s573
                $region69: #{swin2sr_output_forward.1} parent=65 // loop_header_branch
                  %531 = sbr.rel (%p528) target = $region73
                $region70: #{swin2sr_output_forward.1} parent=65 // loop_body
                  %v535 = vld [vmem:[%s533] sm:$0xff]
                  %536 = vst [vmem:[%s534] sm:$0xff] %v535
                  %v537 = vld [vmem:[%s533 + $0x8] sm:$0xff]
                  %538 = vst [vmem:[%s534 + $0x8] sm:$0xff] %v537
                  %v539 = vld [vmem:[%s533 + $0x10] sm:$0xff]
                  %540 = vst [vmem:[%s534 + $0x10] sm:$0xff] %v539
                  %v541 = vld [vmem:[%s533 + $0x18] sm:$0xff]
                  %542 = vst [vmem:[%s534 + $0x18] sm:$0xff] %v541
                  %v543 = vld [vmem:[%s533 + $0x20] sm:$0xff]
                  %544 = vst [vmem:[%s534 + $0x20] sm:$0xff] %v543
                  %v545 = vld [vmem:[%s533 + $0x28] sm:$0xff]
                  %546 = vst [vmem:[%s534 + $0x28] sm:$0xff] %v545
                  %v547 = vld [vmem:[%s533 + $0x30] sm:$0xff]
                  %548 = vst [vmem:[%s534 + $0x30] sm:$0xff] %v547
                  %v549 = vld [vmem:[%s533 + $0x38] sm:$0xff]
                  %550 = vst [vmem:[%s534 + $0x38] sm:$0xff] %v549
                  %v551 = vld [vmem:[%s533 + $0x40] sm:$0xff]
                  %552 = vst [vmem:[%s534 + $0x40] sm:$0xff] %v551
                  %v553 = vld [vmem:[%s533 + $0x48] sm:$0xff]
                  %554 = vst [vmem:[%s534 + $0x48] sm:$0xff] %v553
                  %v555 = vld [vmem:[%s533 + $0x50] sm:$0xff]
                  %556 = vst [vmem:[%s534 + $0x50] sm:$0xff] %v555
                  %v557 = vld [vmem:[%s533 + $0x58] sm:$0xff]
                  %558 = vst [vmem:[%s534 + $0x58] sm:$0xff] %v557
                  %v559 = vld [vmem:[%s533 + $0x60] sm:$0xff]
                  %560 = vst [vmem:[%s534 + $0x60] sm:$0xff] %v559
                  %v561 = vld [vmem:[%s533 + $0x68] sm:$0xff]
                  %562 = vst [vmem:[%s534 + $0x68] sm:$0xff] %v561
                  %v563 = vld [vmem:[%s533 + $0x70] sm:$0xff]
                  %564 = vst [vmem:[%s534 + $0x70] sm:$0xff] %v563
                  %v565 = vld [vmem:[%s533 + $0x78] sm:$0xff]
                  %566 = vst [vmem:[%s534 + $0x78] sm:$0xff] %v565
                  %s567 = sadd.s32 1, %s532
                  %p568 = scmp.ge.s32.totalorder %s567, %s525
                  %s569 = scalar_select %p568, 0, %s567
                  %s570 = smul.u32 %s569, 128
                  %s571 = smul.u32 %s569, 128
                  %s572 = scalar_lea.vmem %s429, %s570 [#allocation2]
                  %s573 = scalar_lea.vmem %s440, %s571
                $region71: #{swin2sr_output_forward.1} parent=65 // loop_footer
                  %s529 = sadd.s32 %s527, 1
                $region72: #{swin2sr_output_forward.1} parent=65 // loop_footer_branch
                  %526 = sbr.rel target = $region68
                $region73: #{swin2sr_output_forward.1} parent=65 // loop_exit
                  _
                %s574 = sshrl.u32 %s436, 4
                %s575 = sand.u32 %s436, 15
                %s576 = smul.u32 %s574, 16
                %s577 = smul.u32 8, %s576
                %s578 = scalar_lea.vmem %s429, %s577 [#allocation2]
                %s579 = smul.u32 8, %s576
                %s580 = scalar_lea.vmem %s440, %s579
                // While loop
                $region74: #{swin2sr_output_forward.1} parent=65 // loop_pre_header
                  _
                $region75: #{swin2sr_output_forward.1} parent=65 // loop_header
                  %s582 = sphi 0, %s584
                  %p583 = scmp.ge.s32.totalorder %s582, %s575
                  %s587 = sphi 0, %s594
                  %s588 = sphi %s578, %s597
                  %s589 = sphi %s580, %s598
                $region76: #{swin2sr_output_forward.1} parent=65 // loop_header_branch
                  %586 = sbr.rel (%p583) target = $region80
                $region77: #{swin2sr_output_forward.1} parent=65 // loop_body
                  %v590 = vld [vmem:[%s588] sm:$0xff]
                  %591 = vst [vmem:[%s589] sm:$0xff] %v590
                  %s592 = sadd.s32 1, %s587
                  %p593 = scmp.ge.s32.totalorder %s592, %s575
                  %s594 = scalar_select %p593, 0, %s592
                  %s595 = smul.u32 %s594, 8
                  %s596 = smul.u32 %s594, 8
                  %s597 = scalar_lea.vmem %s578, %s595 [#allocation2]
                  %s598 = scalar_lea.vmem %s580, %s596
                $region78: #{swin2sr_output_forward.1} parent=65 // loop_footer
                  %s584 = sadd.s32 %s582, 1
                $region79: #{swin2sr_output_forward.1} parent=65 // loop_footer_branch
                  %581 = sbr.rel target = $region75
                $region80: #{swin2sr_output_forward.1} parent=65 // loop_exit
                  _
              $region66: #{swin2sr_output_forward.1} parent=43 // pred_fallthru
                _
              // Predicated region
              $region81: #{swin2sr_output_forward.1} parent=43 // pred_check
                _
              $region82: #{swin2sr_output_forward.1} parent=43 // pred_check_branch
                %600 = sbr.rel target = $region84
              $region83: #{swin2sr_output_forward.1} parent=43 // pred_region
                _
              $region84: #{swin2sr_output_forward.1} parent=43 // pred_fallthru
                _
            $region44: #{swin2sr_output_forward.1} parent=39 // pred_fallthru
              _
            // Predicated region
            $region45: #{swin2sr_output_forward.1} parent=39 // pred_check
              _
            $region46: #{swin2sr_output_forward.1} parent=39 // pred_check_branch
              %447 = sbr.rel target = $region48
            $region47: #{swin2sr_output_forward.1} parent=39 // pred_region
              %s449 = sshrl.u32 %s436, 4
              // While loop
              $region49: #{swin2sr_output_forward.1} parent=47 // loop_pre_header
                _
              $region50: #{swin2sr_output_forward.1} parent=47 // loop_header
                %s451 = sphi 0, %s453
                %p452 = scmp.ge.s32.totalorder %s451, %s449
                %s456 = sphi 0, %s493
                %s457 = sphi %s429, %s496
                %s458 = sphi %s440, %s497
              $region51: #{swin2sr_output_forward.1} parent=47 // loop_header_branch
                %455 = sbr.rel (%p452) target = $region55
              $region52: #{swin2sr_output_forward.1} parent=47 // loop_body
                %v459 = vld [vmem:[%s457] sm:$0xff]
                %460 = vst [vmem:[%s458] sm:$0xff] %v459
                %v461 = vld [vmem:[%s457 + $0x8] sm:$0xff]
                %462 = vst [vmem:[%s458 + $0x8] sm:$0xff] %v461
                %v463 = vld [vmem:[%s457 + $0x10] sm:$0xff]
                %464 = vst [vmem:[%s458 + $0x10] sm:$0xff] %v463
                %v465 = vld [vmem:[%s457 + $0x18] sm:$0xff]
                %466 = vst [vmem:[%s458 + $0x18] sm:$0xff] %v465
                %v467 = vld [vmem:[%s457 + $0x20] sm:$0xff]
                %468 = vst [vmem:[%s458 + $0x20] sm:$0xff] %v467
                %v469 = vld [vmem:[%s457 + $0x28] sm:$0xff]
                %470 = vst [vmem:[%s458 + $0x28] sm:$0xff] %v469
                %v471 = vld [vmem:[%s457 + $0x30] sm:$0xff]
                %472 = vst [vmem:[%s458 + $0x30] sm:$0xff] %v471
                %v473 = vld [vmem:[%s457 + $0x38] sm:$0xff]
                %474 = vst [vmem:[%s458 + $0x38] sm:$0xff] %v473
                %v475 = vld [vmem:[%s457 + $0x40] sm:$0xff]
                %476 = vst [vmem:[%s458 + $0x40] sm:$0xff] %v475
                %v477 = vld [vmem:[%s457 + $0x48] sm:$0xff]
                %478 = vst [vmem:[%s458 + $0x48] sm:$0xff] %v477
                %v479 = vld [vmem:[%s457 + $0x50] sm:$0xff]
                %480 = vst [vmem:[%s458 + $0x50] sm:$0xff] %v479
                %v481 = vld [vmem:[%s457 + $0x58] sm:$0xff]
                %482 = vst [vmem:[%s458 + $0x58] sm:$0xff] %v481
                %v483 = vld [vmem:[%s457 + $0x60] sm:$0xff]
                %484 = vst [vmem:[%s458 + $0x60] sm:$0xff] %v483
                %v485 = vld [vmem:[%s457 + $0x68] sm:$0xff]
                %486 = vst [vmem:[%s458 + $0x68] sm:$0xff] %v485
                %v487 = vld [vmem:[%s457 + $0x70] sm:$0xff]
                %488 = vst [vmem:[%s458 + $0x70] sm:$0xff] %v487
                %v489 = vld [vmem:[%s457 + $0x78] sm:$0xff]
                %490 = vst [vmem:[%s458 + $0x78] sm:$0xff] %v489
                %s491 = sadd.s32 1, %s456
                %p492 = scmp.ge.s32.totalorder %s491, %s449
                %s493 = scalar_select %p492, 0, %s491
                %s494 = smul.u32 %s493, 128
                %s495 = smul.u32 %s493, 128
                %s496 = scalar_lea.vmem %s429, %s494 [#allocation2]
                %s497 = scalar_lea.vmem %s440, %s495
              $region53: #{swin2sr_output_forward.1} parent=47 // loop_footer
                %s453 = sadd.s32 %s451, 1
              $region54: #{swin2sr_output_forward.1} parent=47 // loop_footer_branch
                %450 = sbr.rel target = $region50
              $region55: #{swin2sr_output_forward.1} parent=47 // loop_exit
                _
              %s498 = sshrl.u32 %s436, 4
              %s499 = sand.u32 %s436, 15
              %s500 = smul.u32 %s498, 16
              %s501 = smul.u32 8, %s500
              %s502 = scalar_lea.vmem %s429, %s501 [#allocation2]
              %s503 = smul.u32 8, %s500
              %s504 = scalar_lea.vmem %s440, %s503
              // While loop
              $region56: #{swin2sr_output_forward.1} parent=47 // loop_pre_header
                _
              $region57: #{swin2sr_output_forward.1} parent=47 // loop_header
                %s506 = sphi 0, %s508
                %p507 = scmp.ge.s32.totalorder %s506, %s499
                %s511 = sphi 0, %s518
                %s512 = sphi %s502, %s521
                %s513 = sphi %s504, %s522
              $region58: #{swin2sr_output_forward.1} parent=47 // loop_header_branch
                %510 = sbr.rel (%p507) target = $region62
              $region59: #{swin2sr_output_forward.1} parent=47 // loop_body
                %v514 = vld [vmem:[%s512] sm:$0xff]
                %515 = vst [vmem:[%s513] sm:$0xff] %v514
                %s516 = sadd.s32 1, %s511
                %p517 = scmp.ge.s32.totalorder %s516, %s499
                %s518 = scalar_select %p517, 0, %s516
                %s519 = smul.u32 %s518, 8
                %s520 = smul.u32 %s518, 8
                %s521 = scalar_lea.vmem %s502, %s519 [#allocation2]
                %s522 = scalar_lea.vmem %s504, %s520
              $region60: #{swin2sr_output_forward.1} parent=47 // loop_footer
                %s508 = sadd.s32 %s506, 1
              $region61: #{swin2sr_output_forward.1} parent=47 // loop_footer_branch
                %505 = sbr.rel target = $region57
              $region62: #{swin2sr_output_forward.1} parent=47 // loop_exit
                _
            $region48: #{swin2sr_output_forward.1} parent=39 // pred_fallthru
              _
          $region40: #{swin2sr_output_forward.1} parent=35 // pred_fallthru
            _
          %601 = vnop
        $region36: #{swin2sr_output_forward.1} parent=31 // pred_fallthru
          _
      $region32: #{swin2sr_output_forward.1} parent=5 // pred_fallthru
        _
      %p602 = scmp.le.s32.totalorder 2, %s9
      // Predicated region
      $region85: #{swin2sr_output_forward.1} parent=5 // pred_check
        %p603 = pneg %p602
      $region86: #{swin2sr_output_forward.1} parent=5 // pred_check_branch
        %605 = sbr.rel (%p603) target = $region88
      $region87: #{swin2sr_output_forward.1} parent=5 // pred_region
        %s606 = ssub.s32 %s9, 2
        // Predicated region
        $region89: #{swin2sr_output_forward.1} parent=87 // pred_check
          %p607 = pneg %p106
        $region90: #{swin2sr_output_forward.1} parent=87 // pred_check_branch
          %609 = sbr.rel (%p607) target = $region92
        $region91: #{swin2sr_output_forward.1} parent=87 // pred_region
          %s610 = sand.u32 %s91, 1
          %s611 = sand.u32 %s91, 1
          %s612 = smul.addr %s611, 128
          %s613 = scalar_lea.vmem [#allocation2], %s612
        $region92: #{swin2sr_output_forward.1} parent=87 // pred_fallthru
          _
      $region88: #{swin2sr_output_forward.1} parent=5 // pred_fallthru
        _
    $region6: #{swin2sr_output_forward.1} parent=1 // loop_footer
      %s13 = sadd.s32 1, %s9
    $region7: #{swin2sr_output_forward.1} parent=1 // loop_footer_branch
      %8 = sbr.rel target = $region3
    $region8: #{swin2sr_output_forward.1} parent=1 // loop_exit
      _

</llo_original>
